<compile_context>
chip_gen: v7x
topology: tpu7x:2x2x1
jax: 0.10.0
libtpu: 0.0.40
codegen_flags: <defaults>
</compile_context>

<pallas_src>
import functools

import jax
import jax.numpy as jnp
import numpy as np
from jax.experimental import pallas as pl
from jax.experimental.pallas import tpu as pltpu

_LANE = 128


def _round_up(x, m):
    return (x + m - 1) // m * m


@functools.lru_cache(maxsize=1)
def _vmem_budget_bytes():
    """(double-buffered working-set budget, scoped vmem limit) in bytes."""
    try:
        info = pltpu.get_tpu_info()
        phys = int(getattr(info, "vmem_capacity_bytes", 64 * 1024 * 1024))
    except Exception:  # conservative fallback (v7x per-TensorCore VMEM)
        phys = 64 * 1024 * 1024
    # Cap the per-step working set at half of physical VMEM (v7x only has 64 MiB
    # per TensorCore) and never above 32 MiB so v5e/v6e stay comfortable; give
    # the compiler some extra headroom in the scoped limit.
    work = min(phys // 2, 32 * 1024 * 1024)
    limit = min(max(phys - 8 * 1024 * 1024, work), work + 8 * 1024 * 1024)
    return work, limit


def _choose_tiling(N, D, HW, work_budget):
    """Pick (nb, tile_w, hw_pad): batch fold, lane-tile width, padded row length."""
    # One grid step touches, per lane column and per sample, the x block, the
    # prob block and the dmap row: (2*D + 1) f32 values, double-buffered.
    bytes_per_lane = 2 * (2 * D + 1) * 4
    max_lanes = max(_LANE, (work_budget // bytes_per_lane) // _LANE * _LANE)
    hw_pad = _round_up(HW, _LANE)

    if hw_pad <= max_lanes:
        # Whole spatial row fits in one lane tile; fold batch samples into the
        # same block so small pyramid levels still issue fat DMAs.
        tile_w = hw_pad
        nb = max(1, min(N, max_lanes // tile_w))
        # Keep >= 2 grid steps so both v7x TensorCores (megacore) get work.
        if nb > 1 and -(-N // nb) < 2:
            nb = max(1, (N + 1) // 2)
        while N % nb:
            nb -= 1
    else:
        # Row larger than the budget: one sample per block, balanced lane tiles
        # (bounds padding waste to < 128 lanes per tile).
        nb = 1
        n_tiles = -(-hw_pad // max_lanes)
        tile_w = _round_up(-(-hw_pad // n_tiles), _LANE)
        hw_pad = tile_w * n_tiles

    # If everything collapsed into a single grid step, split the lane axis once
    # so a megacore / v7x chip can still parallelise across TensorCores.
    if (N // nb) * (hw_pad // tile_w) < 2 and tile_w >= 2 * _LANE and tile_w % (2 * _LANE) == 0:
        tile_w //= 2
    return nb, tile_w, hw_pad


def _disp_regression_kernel(disp_ref, x_ref, prob_ref, dmap_ref):
    # disp_ref : (D, 1)                   disparity value of each bin
    # x_ref    : (D, TW) or (Nb, D, TW)   raw cost-volume block
    # prob_ref : same shape as x_ref      softmax probabilities (output)
    # dmap_ref : (1, TW) or (Nb, 1, TW)   expected disparity     (output)
    x = x_ref[...].astype(jnp.float32)
    m = jnp.max(x, axis=-2, keepdims=True)
    e = jnp.exp(x - m)
    s = jnp.sum(e, axis=-2, keepdims=True)
    d = disp_ref[...]                                  # (D, 1), broadcasts over lanes
    # Weighted sum is taken on the un-normalised exponentials so it does not
    # wait on the reciprocal; one small (1, TW) multiply normalises at the end.
    w = jnp.sum(e * d, axis=-2, keepdims=True)
    inv = pl.reciprocal(s, approx=False)               # exact: prob checked to 1e-6
    prob_ref[...] = (e * inv).astype(prob_ref.dtype)
    dmap_ref[...] = (w * inv).astype(dmap_ref.dtype)


@functools.partial(
    jax.jit,
    static_argnames=("nb", "tile_w", "hw_pad", "vmem_limit", "prob_dtype"),
)
def _disp_regression_call(x_nchw, disp_col, *, nb, tile_w, hw_pad, vmem_limit, prob_dtype):
    N, D, H, W = x_nchw.shape
    HW = H * W
    x_flat = x_nchw.reshape(N, D, HW)
    if hw_pad != HW:
        # Pad the lane axis; padded columns are independent and sliced off below.
        x_flat = jnp.pad(x_flat, ((0, 0), (0, 0), (0, hw_pad - HW)))

    grid = (N // nb, hw_pad // tile_w)

    if nb == 1:
        # Squeeze the unit batch dim out of the kernel view: 2-D lane-dense tiles.
        x_block = (pl.Squeezed(), D, tile_w)
        d_block = (pl.Squeezed(), 1, tile_w)
    else:
        x_block = (nb, D, tile_w)
        d_block = (nb, 1, tile_w)

    prob_flat, dmap_flat = pl.pallas_call(
        _disp_regression_kernel,
        out_shape=(
            jax.ShapeDtypeStruct((N, D, hw_pad), prob_dtype),
            jax.ShapeDtypeStruct((N, 1, hw_pad), x_nchw.dtype),
        ),
        grid_spec=pltpu.PrefetchScalarGridSpec(
            num_scalar_prefetch=0,
            grid=grid,
            in_specs=[
                pl.BlockSpec((D, 1), lambda n, w: (0, 0)),       # disparity bins
                pl.BlockSpec(x_block, lambda n, w: (n, 0, w)),   # cost volume
            ],
            out_specs=[
                pl.BlockSpec(x_block, lambda n, w: (n, 0, w)),   # probabilities
                pl.BlockSpec(d_block, lambda n, w: (n, 0, w)),   # disparity map
            ],
        ),
        compiler_params=pltpu.CompilerParams(
            dimension_semantics=("parallel", "parallel"),
            vmem_limit_bytes=vmem_limit,
        ),
    )(disp_col, x_flat)

    prob = prob_flat[:, :, :HW].reshape(N, D, H, W)
    dmap = dmap_flat[:, 0, :HW].reshape(N, H, W)
    return dmap, prob


def disp_regression_single(x_nchw, disp_col, prob_dtype=None):
    """x_nchw: (N, D, H, W); disp_col: (D, 1) float32."""
    assert x_nchw.ndim == 4
    N, D, H, W = x_nchw.shape
    assert disp_col.shape == (D, 1)
    work, limit = _vmem_budget_bytes()
    nb, tile_w, hw_pad = _choose_tiling(N, D, H * W, work)
    pdt = np.dtype(prob_dtype) if prob_dtype is not None else np.dtype(x_nchw.dtype)
    return _disp_regression_call(
        x_nchw, disp_col,
        nb=nb, tile_w=tile_w, hw_pad=hw_pad, vmem_limit=limit, prob_dtype=pdt,
    )


class DispRegressionPallas:
    """JAX/Pallas soft-argmin disparity regression over PSMNet aggregated cost volumes."""

    def __init__(self, mindisp, maxdisp, level, prob_dtype=None):
        multiplier = 4
        disparity = (
            np.arange(int(multiplier * level), dtype=np.float64)
            * ((maxdisp - mindisp) / float(multiplier * level))
            + mindisp
        )
        # Stored as a (D, 1) column so it sits cleanly on the sublane axis.
        self.disp_col = jnp.asarray(disparity.reshape(-1, 1), dtype=jnp.float32)
        # prob_dtype=jnp.bfloat16 halves the dominant HBM stream (mem-bound op)
        # when the caller tolerates bf16 probabilities; default keeps exact f32.
        self.prob_dtype = prob_dtype

    def __call__(self, x_list):
        disparity_out, prob_out = [], []
        for sample in x_list:
            dmap, prob = disp_regression_single(sample, self.disp_col, self.prob_dtype)
            disparity_out.append(dmap)
            prob_out.append(prob)
        return disparity_out, prob_out


def _reference(x_list, disp_col):
    """Pure-JAX reference matching the PyTorch forward."""
    disparity_out, prob_out = [], []
    disp = disp_col.reshape(1, -1, 1, 1)
    for sample in x_list:
        p = jax.nn.softmax(sample.astype(jnp.float32), axis=1)
        disparity_out.append(jnp.sum(p * disp, axis=1))
        prob_out.append(p)
    return disparity_out, prob_out


if __name__ == "__main__":
    key = jax.random.PRNGKey(0)

    mindisp, maxdisp, level = 0.0, 64.0, 4      # -> D = 4 * level = 16 disparity bins
    D = 4 * level
    module = DispRegressionPallas(mindisp, maxdisp, level)

    # Three small cases exercising the tiling paths:
    #   (4,16,16,16): tiny H*W -> batch samples folded into one block, 2 grid steps
    #   (1,16,15,18): ragged H*W=270 -> padded to a lane multiple, sliced back
    #   (2,16,32,64): larger volume -> squeezed unit-batch blocks, 2048-lane tiles
    k1, k2, k3 = jax.random.split(key, 3)
    x_list = [
        jax.random.normal(k1, (4, D, 16, 16), dtype=jnp.float32),
        jax.random.normal(k2, (1, D, 15, 18), dtype=jnp.float32),
        jax.random.normal(k3, (2, D, 32, 64), dtype=jnp.float32),
    ]

    disparity_out, prob_out = module(x_list)
    jax.block_until_ready((disparity_out, prob_out))

    # Correctness check against the pure-JAX reference.
    ref_disp, ref_prob = _reference(x_list, module.disp_col)
    for x, d, rd, p, rp in zip(x_list, disparity_out, ref_disp, prob_out, ref_prob):
        N, _, H, W = x.shape
        assert d.shape == (N, H, W)
        assert p.shape == (N, D, H, W)
        np.testing.assert_allclose(np.asarray(d), np.asarray(rd), rtol=1e-5, atol=1e-4)
        np.testing.assert_allclose(np.asarray(p), np.asarray(rp), rtol=1e-5, atol=1e-6)

    print("KERNEL_OK")
</pallas_src>

<mosaic_0001>
module attributes {stable_mosaic.version = 11 : i64} {
  func.func @_disp_regression_kernel(%arg0: i32, %arg1: i32, %arg2: memref<16x1xf32, #tpu.memory_space<vmem>>, %arg3: memref<2x16x256xf32, #tpu.memory_space<vmem>>, %arg4: memref<2x16x256xf32, #tpu.memory_space<vmem>>, %arg5: memref<2x1x256xf32, #tpu.memory_space<vmem>>) attributes {dimension_semantics = [#tpu.dimension_semantics<parallel>, #tpu.dimension_semantics<parallel>], iteration_bounds = array<i64: 2, 1>, scalar_prefetch = 0 : i64, scratch_operands = 0 : i64, tpu.core_type = #tpu.core_type<tc>, window_params = [{pipeline_mode = #tpu.pipeline_mode<synchronous>, transform_indices = @transform_0, window_bounds = array<i64: 16, 1>}, {transform_indices = @transform_1, window_bounds = array<i64: 2, 16, 256>}, {transform_indices = @transform_2, window_bounds = array<i64: 2, 16, 256>}, {transform_indices = @transform_3, window_bounds = array<i64: 2, 1, 256>}]} {
    %c0 = arith.constant 0 : index
    %c0_0 = arith.constant 0 : index
    %c0_1 = arith.constant 0 : index
    %0 = vector.load %arg3[%c0, %c0_0, %c0_1] : memref<2x16x256xf32, #tpu.memory_space<vmem>>, vector<2x16x256xf32>
    %cst = arith.constant dense<0xFF800000> : vector<2x256xf32>
    %1 = vector.multi_reduction <maximumf>, %0, %cst [1] : vector<2x16x256xf32> to vector<2x256xf32>
    %2 = vector.shape_cast %1 : vector<2x256xf32> to vector<2x1x256xf32>
    %3 = vector.broadcast %2 : vector<2x1x256xf32> to vector<2x16x256xf32>
    %4 = arith.subf %0, %3 : vector<2x16x256xf32>
    %5 = math.exp %4 : vector<2x16x256xf32>
    %cst_2 = arith.constant dense<0.000000e+00> : vector<2x256xf32>
    %6 = vector.multi_reduction <add>, %5, %cst_2 [1] : vector<2x16x256xf32> to vector<2x256xf32>
    %7 = vector.shape_cast %6 : vector<2x256xf32> to vector<2x1x256xf32>
    %c0_3 = arith.constant 0 : index
    %c0_4 = arith.constant 0 : index
    %8 = vector.load %arg2[%c0_3, %c0_4] : memref<16x1xf32, #tpu.memory_space<vmem>>, vector<16x1xf32>
    %9 = vector.shape_cast %8 : vector<16x1xf32> to vector<1x16x1xf32>
    %10 = vector.broadcast %9 : vector<1x16x1xf32> to vector<2x16x256xf32>
    %11 = arith.mulf %5, %10 : vector<2x16x256xf32>
    %cst_5 = arith.constant dense<0.000000e+00> : vector<2x256xf32>
    %12 = vector.multi_reduction <add>, %11, %cst_5 [1] : vector<2x16x256xf32> to vector<2x256xf32>
    %13 = vector.shape_cast %12 : vector<2x256xf32> to vector<2x1x256xf32>
    %14 = tpu.reciprocal %7 : vector<2x1x256xf32> -> vector<2x1x256xf32>
    %15 = vector.broadcast %14 : vector<2x1x256xf32> to vector<2x16x256xf32>
    %16 = arith.mulf %5, %15 : vector<2x16x256xf32>
    %c0_6 = arith.constant 0 : index
    %c0_7 = arith.constant 0 : index
    %c0_8 = arith.constant 0 : index
    %17 = vector.load %arg4[%c0_6, %c0_7, %c0_8] : memref<2x16x256xf32, #tpu.memory_space<vmem>>, vector<2x16x256xf32>
    tpu.vector_store %arg4[%c0_6, %c0_7, %c0_8], %16 {strides = array<i32>} : memref<2x16x256xf32, #tpu.memory_space<vmem>>, vector<2x16x256xf32>,
    %18 = arith.mulf %13, %14 : vector<2x1x256xf32>
    %c0_9 = arith.constant 0 : index
    %c0_10 = arith.constant 0 : index
    %c0_11 = arith.constant 0 : index
    %19 = vector.load %arg5[%c0_9, %c0_10, %c0_11] : memref<2x1x256xf32, #tpu.memory_space<vmem>>, vector<2x1x256xf32>
    tpu.vector_store %arg5[%c0_9, %c0_10, %c0_11], %18 {strides = array<i32>} : memref<2x1x256xf32, #tpu.memory_space<vmem>>, vector<2x1x256xf32>,
    return
  }
  func.func @transform_0(%arg0: i32, %arg1: i32) -> (i32, i32) {
    %c0_i32 = arith.constant 0 : i32
    %c0_i32_0 = arith.constant 0 : i32
    %c0_i32_1 = arith.constant 0 : i32
    return %c0_i32, %c0_i32_0 : i32, i32
  }
  func.func @transform_1(%arg0: i32, %arg1: i32) -> (i32, i32, i32) {
    %c0_i32 = arith.constant 0 : i32
    %c0_i32_0 = arith.constant 0 : i32
    return %arg0, %c0_i32, %arg1 : i32, i32, i32
  }
  func.func @transform_2(%arg0: i32, %arg1: i32) -> (i32, i32, i32) {
    %c0_i32 = arith.constant 0 : i32
    %c0_i32_0 = arith.constant 0 : i32
    return %arg0, %c0_i32, %arg1 : i32, i32, i32
  }
  func.func @transform_3(%arg0: i32, %arg1: i32) -> (i32, i32, i32) {
    %c0_i32 = arith.constant 0 : i32
    %c0_i32_0 = arith.constant 0 : i32
    return %arg0, %c0_i32, %arg1 : i32, i32, i32
  }
}

</mosaic_0001>

<llo_original>
// kernel: squeeze.1
$region0: #{squeeze.1}
  %s0 = inlined_call_operand.vmem [shape: f32[4,256], index: 0, kind: input, shape index: {}]
  %s1 = inlined_call_operand.hbm [shape: f32[4,16,16], index: 1, kind: output, shape index: {}]
  $region1: #{squeeze.1} parent=0
    #allocation0 [shape = 'u8[32768]{0}', space=vmem, size = 0x8000, scoped, tag = 'operand span for operand 1']
    #allocation1 [shape = 's32[1]{0}', space=sflag, size = 0x4, scoped, tag = 'scoped memory for squeeze.1']
    #allocation2 [shape = 'u8[8192]{0}', space=vmem, size = 0x2000, scoped, tag = 'scoped mem for input reshape']
    %2 = vsyncpa [#allocation1], 0
    %s4 = sshllo.u32 0, 4
    %s5 = scalar_lea.vmem %s0, 4
    %v6 = vld [vmem:[%s5] sm:%s4]
    %s7 = scalar_lea.vmem [#allocation2], 8
    %8 = vst [vmem:[%s7] sm:%s4] %v6
    %v9 = vld [vmem:[%s0] sm:%s4]
    %10 = vst [vmem:[#allocation2] sm:%s4] %v9
    %v11 = vld [vmem:[#allocation2] sm:$0xf]
    %vm12 = vcmask 130048
    %13 = vst.msk [vmem:[#allocation0] ss:$16 sm:$0x3] %vm12, %v11
    %14 = vst.msk [vmem:[#allocation0] ss:$16 sm:$0xc] %vm12, %v11
    %s15 = scalar_lea.vmem [#allocation2], 8
    %v16 = vld [vmem:[%s15] sm:$0xf]
    %vm17 = vcmask 130048
    %s18 = scalar_lea.vmem [#allocation0], 8
    %19 = vst.msk [vmem:[%s18] ss:$16 sm:$0x3] %vm17, %v16
    %s20 = scalar_lea.vmem [#allocation0], 8
    %21 = vst.msk [vmem:[%s20] ss:$16 sm:$0xc] %vm17, %v16
    %v22 = vld.sshfl [vmem:[#allocation2] sm:$0xff pattern:$0xb3a29180]
    %23 = vrot.lane.b32.xlu0 %v22, 112
    %v24 = vpop.permute.xlu0 %23
    %vm25 = vcmask 130048
    %s26 = scalar_lea.vmem [#allocation0], 1
    %27 = vst.msk [vmem:[%s26] ss:$8 sm:$0xf] %vm25, %v24
    %s28 = scalar_lea.vmem [#allocation0], 1
    %29 = vst.msk [vmem:[%s28] ss:$8 sm:$0xf0] %vm25, %v24
    %v30 = vld.sshfl [vmem:[#allocation2] sm:$0xff pattern:$0xb3a29180]
    %31 = vrot.lane.b32.xlu0 %v30, 96
    %v32 = vpop.permute.xlu0 %31
    %vm33 = vcmask 130048
    %s34 = scalar_lea.vmem [#allocation0], 2
    %35 = vst.msk [vmem:[%s34] ss:$8 sm:$0xf] %vm33, %v32
    %s36 = scalar_lea.vmem [#allocation0], 2
    %37 = vst.msk [vmem:[%s36] ss:$8 sm:$0xf0] %vm33, %v32
    %v38 = vld.sshfl [vmem:[#allocation2] sm:$0xff pattern:$0xb3a29180]
    %39 = vrot.lane.b32.xlu0 %v38, 80
    %v40 = vpop.permute.xlu0 %39
    %vm41 = vcmask 130048
    %s42 = scalar_lea.vmem [#allocation0], 3
    %43 = vst.msk [vmem:[%s42] ss:$8 sm:$0xf] %vm41, %v40
    %s44 = scalar_lea.vmem [#allocation0], 3
    %45 = vst.msk [vmem:[%s44] ss:$8 sm:$0xf0] %vm41, %v40
    %v46 = vld.sshfl [vmem:[#allocation2] sm:$0xff pattern:$0xb3a29180]
    %47 = vrot.lane.b32.xlu0 %v46, 64
    %v48 = vpop.permute.xlu0 %47
    %vm49 = vcmask 130048
    %s50 = scalar_lea.vmem [#allocation0], 4
    %51 = vst.msk [vmem:[%s50] ss:$8 sm:$0xf] %vm49, %v48
    %s52 = scalar_lea.vmem [#allocation0], 4
    %53 = vst.msk [vmem:[%s52] ss:$8 sm:$0xf0] %vm49, %v48
    %v54 = vld.sshfl [vmem:[#allocation2] sm:$0xff pattern:$0xb3a29180]
    %55 = vrot.lane.b32.xlu0 %v54, 48
    %v56 = vpop.permute.xlu0 %55
    %vm57 = vcmask 130048
    %s58 = scalar_lea.vmem [#allocation0], 5
    %59 = vst.msk [vmem:[%s58] ss:$8 sm:$0xf] %vm57, %v56
    %s60 = scalar_lea.vmem [#allocation0], 5
    %61 = vst.msk [vmem:[%s60] ss:$8 sm:$0xf0] %vm57, %v56
    %v62 = vld.sshfl [vmem:[#allocation2] sm:$0xff pattern:$0xb3a29180]
    %63 = vrot.lane.b32.xlu0 %v62, 32
    %v64 = vpop.permute.xlu0 %63
    %vm65 = vcmask 130048
    %s66 = scalar_lea.vmem [#allocation0], 6
    %67 = vst.msk [vmem:[%s66] ss:$8 sm:$0xf] %vm65, %v64
    %s68 = scalar_lea.vmem [#allocation0], 6
    %69 = vst.msk [vmem:[%s68] ss:$8 sm:$0xf0] %vm65, %v64
    %v70 = vld.sshfl [vmem:[#allocation2] sm:$0xff pattern:$0xb3a29180]
    %71 = vrot.lane.b32.xlu0 %v70, 16
    %v72 = vpop.permute.xlu0 %71
    %vm73 = vcmask 130048
    %s74 = scalar_lea.vmem [#allocation0], 7
    %75 = vst.msk [vmem:[%s74] ss:$8 sm:$0xf] %vm73, %v72
    %s76 = scalar_lea.vmem [#allocation0], 7
    %77 = vst.msk [vmem:[%s76] ss:$8 sm:$0xf0] %vm73, %v72
    %s79 = ssub.s32 1024, 1024
    %80 = vsyncadd [#allocation1], %s79
    %s82 = sshll.u32 [#allocation0], 4
    %s83 = int_to_ptr.vmem [resolvable:$true] %s82
    %85 = dma.vmem_to_hbm [thread:$0]  %s83, 1024, %s1, [#allocation1]
    %86 = dma.done [#allocation1], 1024
    %87 = vsyncpa [#allocation1], 1

// kernel: _disp_regression_call.1
$region0: #{_disp_regression_call.1}
  #allocation0 [shape = 'u32[]', space=smem, size = 0x4, offset = 0x4, fixed_abs, tag = 'smem constant byte address 0x4 - core index']
  #allocation1 [shape = 'u32[144,128]{1,0:T(1,128)}', space=vmem, size = 0x12000, scoped, tag = 'internal scratch']
  %s0 = inlined_call_operand.vmem [shape: f32[16,1], index: 0, kind: input, shape index: {}]
  %s1 = inlined_call_operand.vmem [shape: f32[4,16,256], index: 1, kind: input, shape index: {}]
  %s2 = inlined_call_operand.vmem [shape: f32[4,16,256], index: 2, kind: output, shape index: {0}]
  %s3 = inlined_call_operand.vmem [shape: f32[4,1,256], index: 3, kind: output, shape index: {1}]
  %4 = xla_tuple %s2, %s3
  %s5 = sld [smem:[#allocation0]]
  $region49: #{_disp_regression_call.1} parent=0
    _
  %s7 = ssub.s32 1, %s5
  %s8 = scalar_select 0, %s7, %s5
  loop: start=0, step=1, limit=4
  $region2: #{_disp_regression_call.1} parent=0 // loop_pre_header
    _
  $region3: #{_disp_regression_call.1} parent=0 // loop_header
    %s10 = sphi 0, %s14
    %p11 = scmp.ge.s32.totalorder %s10, 4
    %s17 = sphi 0, %s29
    %s18 = sphi 0, %s25
    %s19 = sphi 0, %s17
    %s20 = sphi 0, %s18
    %s21 = sphi 0, %s19
    %s22 = sphi 0, %s20
    %s30 = sphi 0, %s30
    %s32 = sphi 0, %s30
    %s33 = sphi 0, %s32
    %s47 = sphi 0, %s33
    %s55 = sphi 0, %s57
    %s58 = sphi 0, %s55
    %s59 = sphi 0, %s58
    %s75 = sphi 0, %s59
    %s83 = sphi 0, %s85
    %s86 = sphi 0, %s83
    %s87 = sphi 0, %s86
    %s103 = sphi 0, %s87
    %s111 = sphi 0, %s113
    %s114 = sphi 0, %s111
    %s115 = sphi 0, %s114
    %s131 = sphi 0, %s115
  $region4: #{_disp_regression_call.1} parent=0 // loop_header_branch
    %13 = sbr.rel (%p11) target = $region8
  $region5: #{_disp_regression_call.1} parent=0 // loop_body
    %s15 = ssub.s32 %s10, 1
    %s16 = ssub.s32 %s10, 2
    %s23 = sadd.s32 1, %s18
    %p24 = scmp.ge.s32.totalorder %s23, 1
    %s25 = scalar_select %p24, 0, %s23
    %s26 = sadd.s32 1, %s17
    %s27 = scalar_select %p24, %s26, %s17
    %p28 = scmp.ge.s32.totalorder %s27, 2
    %s29 = scalar_select %p28, 0, %s27
    %s31 = sadd.s32 %s30, 1
    %p34 = scmp.eq.s32.totalorder %s10, 1
    %p35 = scmp.ne.s32.totalorder %s30, %s32
    %p36 = scmp.eq.s32.totalorder %s10, 0
    %p37 = por %p35, %p36
    %p38 = scmp.ne.s32.totalorder %s30, %s32
    %p39 = scmp.eq.s32.totalorder %s15, 1
    %p40 = por %p38, %p39
    %p41 = scmp.ne.s32.totalorder %s32, %s33
    %p42 = scmp.eq.s32.totalorder %s15, 0
    %p43 = por %p41, %p42
    %p44 = scmp.ne.s32.totalorder %s32, %s33
    %p45 = scmp.eq.s32.totalorder %s16, 1
    %p46 = por %p44, %p45
    %p48 = scmp.ne.s32.totalorder %s33, %s47
    %p49 = scmp.eq.s32.totalorder %s16, 0
    %p50 = por %p48, %p49
    %s51 = ssub.s32 %s17, %s29
    %s52 = ssub.s32 %s18, %s25
    %s53 = sor.u32 %s51, %s52
    %p54 = scmp.eq.s32.totalorder %s53, 0
    %s56 = sadd.s32 %s55, 1
    %s57 = scalar_select %p54, %s55, %s56
    %p60 = pneg %p54
    %p61 = scmp.eq.s32.totalorder %s10, 1
    %p62 = por %p60, %p61
    %p63 = scmp.ne.s32.totalorder %s55, %s58
    %p64 = scmp.eq.s32.totalorder %s10, 0
    %p65 = por %p63, %p64
    %p66 = scmp.ne.s32.totalorder %s55, %s58
    %p67 = scmp.eq.s32.totalorder %s15, 1
    %p68 = por %p66, %p67
    %p69 = scmp.ne.s32.totalorder %s58, %s59
    %p70 = scmp.eq.s32.totalorder %s15, 0
    %p71 = por %p69, %p70
    %p72 = scmp.ne.s32.totalorder %s58, %s59
    %p73 = scmp.eq.s32.totalorder %s16, 1
    %p74 = por %p72, %p73
    %p76 = scmp.ne.s32.totalorder %s59, %s75
    %p77 = scmp.eq.s32.totalorder %s16, 0
    %p78 = por %p76, %p77
    %s79 = ssub.s32 %s17, %s29
    %s80 = ssub.s32 %s18, %s25
    %s81 = sor.u32 %s79, %s80
    %p82 = scmp.eq.s32.totalorder %s81, 0
    %s84 = sadd.s32 %s83, 1
    %s85 = scalar_select %p82, %s83, %s84
    %p88 = pneg %p82
    %p89 = scmp.eq.s32.totalorder %s10, 1
    %p90 = por %p88, %p89
    %p91 = scmp.ne.s32.totalorder %s83, %s86
    %p92 = scmp.eq.s32.totalorder %s10, 0
    %p93 = por %p91, %p92
    %p94 = scmp.ne.s32.totalorder %s83, %s86
    %p95 = scmp.eq.s32.totalorder %s15, 1
    %p96 = por %p94, %p95
    %p97 = scmp.ne.s32.totalorder %s86, %s87
    %p98 = scmp.eq.s32.totalorder %s15, 0
    %p99 = por %p97, %p98
    %p100 = scmp.ne.s32.totalorder %s86, %s87
    %p101 = scmp.eq.s32.totalorder %s16, 1
    %p102 = por %p100, %p101
    %p104 = scmp.ne.s32.totalorder %s87, %s103
    %p105 = scmp.eq.s32.totalorder %s16, 0
    %p106 = por %p104, %p105
    %s107 = ssub.s32 %s17, %s29
    %s108 = ssub.s32 %s18, %s25
    %s109 = sor.u32 %s107, %s108
    %p110 = scmp.eq.s32.totalorder %s109, 0
    %s112 = sadd.s32 %s111, 1
    %s113 = scalar_select %p110, %s111, %s112
    %p116 = pneg %p110
    %p117 = scmp.eq.s32.totalorder %s10, 1
    %p118 = por %p116, %p117
    %p119 = scmp.ne.s32.totalorder %s111, %s114
    %p120 = scmp.eq.s32.totalorder %s10, 0
    %p121 = por %p119, %p120
    %p122 = scmp.ne.s32.totalorder %s111, %s114
    %p123 = scmp.eq.s32.totalorder %s15, 1
    %p124 = por %p122, %p123
    %p125 = scmp.ne.s32.totalorder %s114, %s115
    %p126 = scmp.eq.s32.totalorder %s15, 0
    %p127 = por %p125, %p126
    %p128 = scmp.ne.s32.totalorder %s114, %s115
    %p129 = scmp.eq.s32.totalorder %s16, 1
    %p130 = por %p128, %p129
    %p132 = scmp.ne.s32.totalorder %s115, %s131
    %p133 = scmp.eq.s32.totalorder %s16, 0
    %p134 = por %p132, %p133
    %p135 = scmp.le.s32.totalorder 1, %s10
    %p136 = scmp.lt.s32.totalorder %s10, 3
    %p137 = pnand %p135, %p136
    %p138 = pneg %p137
    // Predicated region
    $region9: #{_disp_regression_call.1} parent=5 // pred_check
      _
    $region10: #{_disp_regression_call.1} parent=5 // pred_check_branch
      %140 = sbr.rel (%p137) target = $region12
    $region11: #{_disp_regression_call.1} parent=5 // pred_region
      %s141 = ssub.s32 %s10, 1
      // Predicated region
      $region13: #{_disp_regression_call.1} parent=11 // pred_check
        %p142 = pneg %p43
      $region14: #{_disp_regression_call.1} parent=11 // pred_check_branch
        %144 = sbr.rel (%p142) target = $region16
      $region15: #{_disp_regression_call.1} parent=11 // pred_region
        _
      $region16: #{_disp_regression_call.1} parent=11 // pred_fallthru
        _
    $region12: #{_disp_regression_call.1} parent=5 // pred_fallthru
      _
    %p145 = scmp.lt.s32.totalorder %s10, 2
    // Predicated region
    $region17: #{_disp_regression_call.1} parent=5 // pred_check
      %p146 = pneg %p145
    $region18: #{_disp_regression_call.1} parent=5 // pred_check_branch
      %148 = sbr.rel (%p146) target = $region20
    $region19: #{_disp_regression_call.1} parent=5 // pred_region
      // Predicated region
      $region21: #{_disp_regression_call.1} parent=19 // pred_check
        %p149 = pneg %p65
      $region22: #{_disp_regression_call.1} parent=19 // pred_check_branch
        %151 = sbr.rel (%p149) target = $region24
      $region23: #{_disp_regression_call.1} parent=19 // pred_region
        %s152 = smul.u32 2, %s17
        %s153 = smul.u32 2, %s18
        %p154 = scmp.lt.s32.totalorder %s152, 3
        %s155 = scalar_select %p154, %s152, 3
        %p156 = scmp.lt.s32.totalorder %s153, 1
        %s157 = scalar_select %p156, %s153, 1
        %s158 = smul.addr %s155, 4
        %s159 = sadd.s32 %s157, %s158
        %s160 = smul.addr %s159, 8
        %s161 = scalar_lea.vmem %s1, %s160
        %s162 = smul.u32 2, %s17
        %s163 = smul.u32 2, %s18
      $region24: #{_disp_regression_call.1} parent=19 // pred_fallthru
        _
    $region20: #{_disp_regression_call.1} parent=5 // pred_fallthru
      _
    %p164 = scmp.le.s32.totalorder 1, %s10
    %p165 = scmp.lt.s32.totalorder %s10, 3
    %p166 = pnand %p164, %p165
    %p167 = pneg %p166
    // Predicated region
    $region25: #{_disp_regression_call.1} parent=5 // pred_check
      _
    $region26: #{_disp_regression_call.1} parent=5 // pred_check_branch
      %169 = sbr.rel (%p166) target = $region28
    $region27: #{_disp_regression_call.1} parent=5 // pred_region
      %s170 = ssub.s32 %s10, 1
      %p171 = pneg %p43
      %p172 = pneg %p40
      %s173 = smul.u32 2, %s19
      %s174 = smul.u32 2, %s20
      %p175 = scmp.lt.s32.totalorder %s173, 3
      %s176 = scalar_select %p175, %s173, 3
      %p177 = scmp.lt.s32.totalorder %s174, 1
      %s178 = scalar_select %p177, %s174, 1
      %s179 = smul.addr %s176, 4
      %s180 = sadd.s32 %s178, %s179
      %s181 = smul.addr %s180, 8
      %s182 = scalar_lea.vmem %s1, %s181
      %p183 = pneg %p71
      %p184 = pneg %p68
      %p185 = pneg %p99
      %p186 = pneg %p96
      %s187 = smul.u32 2, %s19
      %s188 = smul.u32 2, %s20
      %p189 = scmp.lt.s32.totalorder %s187, 3
      %s190 = scalar_select %p189, %s187, 3
      %p191 = scmp.lt.s32.totalorder %s188, 1
      %s192 = scalar_select %p191, %s188, 1
      %s193 = smul.addr %s190, 4
      %s194 = sadd.s32 %s192, %s193
      %s195 = smul.addr %s194, 8
      %s196 = scalar_lea.vmem %s2, %s195
      %p197 = pneg %p127
      %p198 = pneg %p124
      %s199 = smul.u32 2, %s19
      %s200 = smul.u32 2, %s20
      %p201 = scmp.lt.s32.totalorder %s199, 3
      %s202 = scalar_select %p201, %s199, 3
      %p203 = scmp.lt.s32.totalorder %s200, 1
      %s204 = scalar_select %p203, %s200, 1
      %s205 = smul.addr %s202, 2
      %s206 = sadd.s32 %s204, %s205
      %s207 = scalar_lea.vmem %s3, %s206
      %s208 = smul.u32 2, %s19
      %s209 = smul.u32 2, %s20
      %p210 = scmp.lt.s32.totalorder %s208, 3
      %s211 = scalar_select %p210, %s208, 3
      %p212 = scmp.lt.s32.totalorder %s209, 1
      %s213 = scalar_select %p212, %s209, 1
      %s214 = smul.addr %s211, 4
      %s215 = sadd.s32 %s213, %s214
      %s216 = smul.addr %s215, 8
      %s217 = scalar_lea.vmem %s1, %s216
      %s218 = smul.u32 2, %s19
      %s219 = smul.u32 2, %s20
      %s220 = smul.u32 2, %s19
      %s221 = smul.u32 2, %s20
      %p222 = scmp.lt.s32.totalorder %s220, 3
      %s223 = scalar_select %p222, %s220, 3
      %p224 = scmp.lt.s32.totalorder %s221, 1
      %s225 = scalar_select %p224, %s221, 1
      %s226 = smul.addr %s223, 4
      %s227 = sadd.s32 %s225, %s226
      %s228 = smul.addr %s227, 8
      %s229 = scalar_lea.vmem %s2, %s228
      %s230 = smul.u32 2, %s19
      %s231 = smul.u32 2, %s20
      %s232 = smul.u32 2, %s19
      %s233 = smul.u32 2, %s20
      %p234 = scmp.lt.s32.totalorder %s232, 3
      %s235 = scalar_select %p234, %s232, 3
      %p236 = scmp.lt.s32.totalorder %s233, 1
      %s237 = scalar_select %p236, %s233, 1
      %s238 = smul.addr %s235, 2
      %s239 = sadd.s32 %s237, %s238
      %s240 = scalar_lea.vmem %s3, %s239
      %s241 = smul.u32 2, %s19
      %s242 = smul.u32 2, %s20
      %v243 = vld [vmem:[%s217] sm:$0xff]
      %v244 = vld [vmem:[%s217 + $0x8] sm:$0xff]
      %v245 = vld [vmem:[%s217 + $0x10] sm:$0xff]
      %v246 = vld [vmem:[%s217 + $0x18] sm:$0xff]
      %v247 = vld [vmem:[%s217 + $0x20] sm:$0xff]
      %v248 = vld [vmem:[%s217 + $0x28] sm:$0xff]
      %v249 = vld [vmem:[%s217 + $0x30] sm:$0xff]
      %v250 = vld [vmem:[%s217 + $0x38] sm:$0xff]
      %v251 = vmax.f32 %v243, %v245
      %v252 = vrot.slane %v251, 4
      %v253 = vmax.f32 %v251, %v252
      %v254 = vrot.slane %v253, 2
      %v255 = vmax.f32 %v253, %v254
      %v256 = vrot.slane %v255, 1
      %v257 = vmax.f32 %v255, %v256
      %v258 = vmax.f32 %v244, %v246
      %v259 = vrot.slane %v258, 4
      %v260 = vmax.f32 %v258, %v259
      %v261 = vrot.slane %v260, 2
      %v262 = vmax.f32 %v260, %v261
      %v263 = vrot.slane %v262, 1
      %v264 = vmax.f32 %v262, %v263
      %v265 = vmax.f32 %v247, %v249
      %v266 = vrot.slane %v265, 4
      %v267 = vmax.f32 %v265, %v266
      %v268 = vrot.slane %v267, 2
      %v269 = vmax.f32 %v267, %v268
      %v270 = vrot.slane %v269, 1
      %v271 = vmax.f32 %v269, %v270
      %v272 = vmax.f32 %v248, %v250
      %v273 = vrot.slane %v272, 4
      %v274 = vmax.f32 %v272, %v273
      %v275 = vrot.slane %v274, 2
      %v276 = vmax.f32 %v274, %v275
      %v277 = vrot.slane %v276, 1
      %v278 = vmax.f32 %v276, %v277
      %v279 = vsub.f32 %v243, %v257
      %v280 = vsub.f32 %v244, %v264
      %v281 = vsub.f32 %v245, %v257
      %v282 = vsub.f32 %v246, %v264
      %v283 = vsub.f32 %v247, %v271
      %v284 = vsub.f32 %v248, %v278
      %v285 = vsub.f32 %v249, %v271
      %v286 = vsub.f32 %v250, %v278
      %v287 = vmul.f32 %v279, 1.442695
      %v288 = vpow.pop %v287
      %v289 = vmul.f32 %v280, 1.442695
      %v290 = vpow.pop %v289
      %v291 = vmul.f32 %v281, 1.442695
      %v292 = vpow.pop %v291
      %v293 = vmul.f32 %v282, 1.442695
      %v294 = vpow.pop %v293
      %v295 = vmul.f32 %v283, 1.442695
      %v296 = vpow.pop %v295
      %v297 = vmul.f32 %v284, 1.442695
      %v298 = vpow.pop %v297
      %v299 = vmul.f32 %v285, 1.442695
      %v300 = vpow.pop %v299
      %v301 = vmul.f32 %v286, 1.442695
      %v302 = vpow.pop %v301
      %v303 = vadd.f32 %v288, %v292
      %v304 = vrot.slane %v303, 4
      %v305 = vadd.f32 %v303, %v304
      %v306 = vrot.slane %v305, 2
      %v307 = vadd.f32 %v305, %v306
      %v308 = vrot.slane %v307, 1
      %v309 = vadd.f32 %v307, %v308
      %v310 = vadd.f32 %v290, %v294
      %v311 = vrot.slane %v310, 4
      %v312 = vadd.f32 %v310, %v311
      %v313 = vrot.slane %v312, 2
      %v314 = vadd.f32 %v312, %v313
      %v315 = vrot.slane %v314, 1
      %v316 = vadd.f32 %v314, %v315
      %v317 = vadd.f32 %v296, %v300
      %v318 = vrot.slane %v317, 4
      %v319 = vadd.f32 %v317, %v318
      %v320 = vrot.slane %v319, 2
      %v321 = vadd.f32 %v319, %v320
      %v322 = vrot.slane %v321, 1
      %v323 = vadd.f32 %v321, %v322
      %v324 = vadd.f32 %v298, %v302
      %v325 = vrot.slane %v324, 4
      %v326 = vadd.f32 %v324, %v325
      %v327 = vrot.slane %v326, 2
      %v328 = vadd.f32 %v326, %v327
      %v329 = vrot.slane %v328, 1
      %v330 = vadd.f32 %v328, %v329
      %v331 = vld [vmem:[%s0] sm:$0xff]
      %v332 = vld [vmem:[%s0 + $0x8] sm:$0xff]
      %334 = vset.pattern.permute.xlu0 0
      %335 = vperm.xlu0 %334, %v331
      %v336 = vpop.permute.xlu0 %335
      %339 = vset.pattern.permute.xlu0 0
      %340 = vperm.xlu0 %339, %v332
      %v341 = vpop.permute.xlu0 %340
      %v343 = vmul.f32 %v288, %v336
      %v344 = vmul.f32 %v290, %v336
      %v345 = vmul.f32 %v292, %v341
      %v346 = vmul.f32 %v294, %v341
      %v347 = vmul.f32 %v296, %v336
      %v348 = vmul.f32 %v298, %v336
      %v349 = vmul.f32 %v300, %v341
      %v350 = vmul.f32 %v302, %v341
      %v351 = vadd.f32 %v343, %v345
      %v352 = vrot.slane %v351, 4
      %v353 = vadd.f32 %v351, %v352
      %v354 = vrot.slane %v353, 2
      %v355 = vadd.f32 %v353, %v354
      %v356 = vrot.slane %v355, 1
      %v357 = vadd.f32 %v355, %v356
      %v358 = vadd.f32 %v344, %v346
      %v359 = vrot.slane %v358, 4
      %v360 = vadd.f32 %v358, %v359
      %v361 = vrot.slane %v360, 2
      %v362 = vadd.f32 %v360, %v361
      %v363 = vrot.slane %v362, 1
      %v364 = vadd.f32 %v362, %v363
      %v365 = vadd.f32 %v347, %v349
      %v366 = vrot.slane %v365, 4
      %v367 = vadd.f32 %v365, %v366
      %v368 = vrot.slane %v367, 2
      %v369 = vadd.f32 %v367, %v368
      %v370 = vrot.slane %v369, 1
      %v371 = vadd.f32 %v369, %v370
      %v372 = vadd.f32 %v348, %v350
      %v373 = vrot.slane %v372, 4
      %v374 = vadd.f32 %v372, %v373
      %v375 = vrot.slane %v374, 2
      %v376 = vadd.f32 %v374, %v375
      %v377 = vrot.slane %v376, 1
      %v378 = vadd.f32 %v376, %v377
      %v379 = vrcp.pop %v309
      %v380 = vrcp.pop %v316
      %v381 = vrcp.pop %v323
      %v382 = vrcp.pop %v330
      %v383 = vmul.f32 %v288, %v379
      %v384 = vmul.f32 %v290, %v380
      %v385 = vmul.f32 %v292, %v379
      %v386 = vmul.f32 %v294, %v380
      %v387 = vmul.f32 %v296, %v381
      %v388 = vmul.f32 %v298, %v382
      %v389 = vmul.f32 %v300, %v381
      %v390 = vmul.f32 %v302, %v382
      %391 = vst [vmem:[%s229] sm:$0xff] %v383
      %392 = vst [vmem:[%s229 + $0x8] sm:$0xff] %v384
      %393 = vst [vmem:[%s229 + $0x10] sm:$0xff] %v385
      %394 = vst [vmem:[%s229 + $0x18] sm:$0xff] %v386
      %395 = vst [vmem:[%s229 + $0x20] sm:$0xff] %v387
      %396 = vst [vmem:[%s229 + $0x28] sm:$0xff] %v388
      %397 = vst [vmem:[%s229 + $0x30] sm:$0xff] %v389
      %398 = vst [vmem:[%s229 + $0x38] sm:$0xff] %v390
      %v399 = vmul.f32 %v357, %v379
      %v400 = vmul.f32 %v364, %v380
      %v401 = vmul.f32 %v371, %v381
      %v402 = vmul.f32 %v378, %v382
      %v407 = vcombine.low %v399, %v400
      %v409 = vunpack.c.l.s4 1966171168
      %v410 = vunpack.c.0.s8 %v409
      %v411 = vlaneseq
      %v412 = vshrl.u32 %v411, 7
      %v413 = vsub.s32 %v410, %v412
      %v414 = vrot.slane %v407, %v413
      %v416 = vunpack.c.l.s4 1966171168
      %v417 = vunpack.c.0.s8 %v416
      %v418 = vlaneseq
      %v419 = vshrl.u32 %v418, 7
      %v420 = vsub.s32 %v417, %v419
      %v421 = vrot.slane %v414, %v420
      %v422 = vcombine.low %v401, %v402
      %v424 = vunpack.c.l.s4 1966171168
      %v425 = vunpack.c.0.s8 %v424
      %v426 = vlaneseq
      %v427 = vshrl.u32 %v426, 7
      %v428 = vsub.s32 %v425, %v427
      %v429 = vrot.slane %v422, %v428
      %v431 = vunpack.c.l.s4 1966171168
      %v432 = vunpack.c.0.s8 %v431
      %v433 = vlaneseq
      %v434 = vshrl.u32 %v433, 7
      %v435 = vsub.s32 %v432, %v434
      %v436 = vrot.slane %v429, %v435
      %v439 = vlaneseq
      %vm440 = vcmp.ge.s32.totalorder %v439, 0
      %vm441 = vcmp.lt.s32.totalorder %v439, 256
      %vm442 = vmand %vm440, %vm441
      %443 = vst.msk [vmem:[%s240] sm:$0x3] %vm442, %v421
      %444 = vst.msk [vmem:[%s240 + $0x2] sm:$0x3] %vm442, %v436
      %s445 = smul.u32 2, %s19
      %s446 = smul.u32 2, %s20
      %p447 = scmp.lt.s32.totalorder %s445, 3
      %s448 = scalar_select %p447, %s445, 3
      %p449 = scmp.lt.s32.totalorder %s446, 1
      %s450 = scalar_select %p449, %s446, 1
      %s451 = smul.addr %s448, 4
      %s452 = sadd.s32 %s450, %s451
      %s453 = smul.addr %s452, 8
      %s454 = scalar_lea.vmem %s2, %s453
      %s455 = smul.u32 2, %s19
      %s456 = smul.u32 2, %s20
      %p457 = scmp.lt.s32.totalorder %s455, 3
      %s458 = scalar_select %p457, %s455, 3
      %p459 = scmp.lt.s32.totalorder %s456, 1
      %s460 = scalar_select %p459, %s456, 1
      %s461 = smul.addr %s458, 2
      %s462 = sadd.s32 %s460, %s461
      %s463 = scalar_lea.vmem %s3, %s462
      // Predicated region
      $region29: #{_disp_regression_call.1} parent=27 // pred_check
        %p464 = pneg %p96
      $region30: #{_disp_regression_call.1} parent=27 // pred_check_branch
        %466 = sbr.rel (%p464) target = $region32
      $region31: #{_disp_regression_call.1} parent=27 // pred_region
        %s467 = smul.u32 2, %s19
        %s468 = smul.u32 2, %s20
      $region32: #{_disp_regression_call.1} parent=27 // pred_fallthru
        _
      // Predicated region
      $region33: #{_disp_regression_call.1} parent=27 // pred_check
        %p469 = pneg %p124
      $region34: #{_disp_regression_call.1} parent=27 // pred_check_branch
        %471 = sbr.rel (%p469) target = $region36
      $region35: #{_disp_regression_call.1} parent=27 // pred_region
        %s472 = smul.u32 2, %s19
        %s473 = smul.u32 2, %s20
      $region36: #{_disp_regression_call.1} parent=27 // pred_fallthru
        _
    $region28: #{_disp_regression_call.1} parent=5 // pred_fallthru
      _
    %p474 = scmp.le.s32.totalorder 2, %s10
    // Predicated region
    $region37: #{_disp_regression_call.1} parent=5 // pred_check
      %p475 = pneg %p474
    $region38: #{_disp_regression_call.1} parent=5 // pred_check_branch
      %477 = sbr.rel (%p475) target = $region40
    $region39: #{_disp_regression_call.1} parent=5 // pred_region
      %s478 = ssub.s32 %s10, 2
      // Predicated region
      $region41: #{_disp_regression_call.1} parent=39 // pred_check
        %p479 = pneg %p102
      $region42: #{_disp_regression_call.1} parent=39 // pred_check_branch
        %481 = sbr.rel (%p479) target = $region44
      $region43: #{_disp_regression_call.1} parent=39 // pred_region
        %s482 = smul.u32 2, %s21
        %s483 = smul.u32 2, %s22
        %p484 = scmp.lt.s32.totalorder %s482, 3
        %s485 = scalar_select %p484, %s482, 3
        %p486 = scmp.lt.s32.totalorder %s483, 1
        %s487 = scalar_select %p486, %s483, 1
        %s488 = smul.addr %s485, 4
        %s489 = sadd.s32 %s487, %s488
        %s490 = smul.addr %s489, 8
        %s491 = scalar_lea.vmem %s2, %s490
      $region44: #{_disp_regression_call.1} parent=39 // pred_fallthru
        _
      // Predicated region
      $region45: #{_disp_regression_call.1} parent=39 // pred_check
        %p492 = pneg %p130
      $region46: #{_disp_regression_call.1} parent=39 // pred_check_branch
        %494 = sbr.rel (%p492) target = $region48
      $region47: #{_disp_regression_call.1} parent=39 // pred_region
        %s495 = smul.u32 2, %s21
        %s496 = smul.u32 2, %s22
        %p497 = scmp.lt.s32.totalorder %s495, 3
        %s498 = scalar_select %p497, %s495, 3
        %p499 = scmp.lt.s32.totalorder %s496, 1
        %s500 = scalar_select %p499, %s496, 1
        %s501 = smul.addr %s498, 2
        %s502 = sadd.s32 %s500, %s501
        %s503 = scalar_lea.vmem %s3, %s502
      $region48: #{_disp_regression_call.1} parent=39 // pred_fallthru
        _
    $region40: #{_disp_regression_call.1} parent=5 // pred_fallthru
      _
  $region6: #{_disp_regression_call.1} parent=0 // loop_footer
    %s14 = sadd.s32 1, %s10
  $region7: #{_disp_regression_call.1} parent=0 // loop_footer_branch
    %9 = sbr.rel target = $region3
  $region8: #{_disp_regression_call.1} parent=0 // loop_exit
    _

</llo_original>
